<compile_context>
chip_gen: v6e
topology: v6e:2x2x1
jax: 0.10.0
libtpu: 0.0.40
codegen_flags: <defaults>
</compile_context>

<pallas_src>
import jax
import jax.numpy as jnp
from jax.experimental import pallas as pl
from jax.experimental.pallas import tpu as pltpu


def _round_up(x, m):
    return ((x + m - 1) // m) * m


def _make_kernel(fuse_heads: bool, d: int):
    """T_net MLP + Gaussian reparameterization, fused into one kernel body."""
    if fuse_heads:
        def kernel(x_ref, eps_ref, w1_ref, b1_ref, w2_ref, b2_ref, out_ref):
            wdt = w1_ref.dtype                      # MXU compute dtype (f32 or bf16)
            x = x_ref[...].astype(wdt)
            # Layer 1: MXU matmul, f32 accumulation; bias + relu on the VPU in f32.
            h = jnp.dot(x, w1_ref[...], preferred_element_type=jnp.float32)
            h = jnp.maximum(h + b1_ref[...], 0.0)
            hc = h.astype(wdt)
            # Fused [H, 2D] head: mu and log_sigma come out of a single MXU pass,
            # using the full 256-wide MXU N dimension (v6e/v7x) when 2D <= 256.
            y = (jnp.dot(hc, w2_ref[...], preferred_element_type=jnp.float32)
                 + b2_ref[...])
            mu, log_sigma = y[:, :d], y[:, d:]
            eps = eps_ref[...].astype(jnp.float32)
            # No clamp on log_sigma: matches the un-clamped PyTorch reference.
            out_ref[...] = (mu + jnp.exp(log_sigma) * eps).astype(out_ref.dtype)
        return kernel

    def kernel(x_ref, eps_ref, w1_ref, b1_ref, w2mu_ref, w2ls_ref,
               b2mu_ref, b2ls_ref, out_ref):
        wdt = w1_ref.dtype
        x = x_ref[...].astype(wdt)
        h = jnp.dot(x, w1_ref[...], preferred_element_type=jnp.float32)
        h = jnp.maximum(h + b1_ref[...], 0.0)
        hc = h.astype(wdt)
        # Split heads (each head >= 128 lanes): two lane-aligned MXU matmuls,
        # no post-hoc intra-vreg slicing of a fused result.
        mu = (jnp.dot(hc, w2mu_ref[...], preferred_element_type=jnp.float32)
              + b2mu_ref[...])
        log_sigma = (jnp.dot(hc, w2ls_ref[...], preferred_element_type=jnp.float32)
                     + b2ls_ref[...])
        eps = eps_ref[...].astype(jnp.float32)
        out_ref[...] = (mu + jnp.exp(log_sigma) * eps).astype(out_ref.dtype)
    return kernel


def gaussian_entropic_not_forward(x, params, seed, *, block_rows=None,
                                  use_bf16_weights=False):
    """forward(x) = mu + exp(log_sigma) * N(0, 1), with T_net = 2-layer MLP, fused."""
    w1, b1, w2_mu, b2_mu, w2_ls, b2_ls = params
    B, D = x.shape
    H = w1.shape[1]

    # --- parameter prep ---------------------------------------------------
    # Pad the hidden dim to a multiple of 128 (lane-dense layer-1 output and MXU
    # K dim of layer 2). Zero padding is exact: padded units are relu(0)=0 and
    # feed zero rows of W2.
    H_pad = _round_up(H, 128)
    if H_pad != H:
        w1 = jnp.pad(w1, ((0, 0), (0, H_pad - H)))
        b1 = jnp.pad(b1, ((0, 0), (0, H_pad - H)))
        w2_mu = jnp.pad(w2_mu, ((0, H_pad - H), (0, 0)))
        w2_ls = jnp.pad(w2_ls, ((0, H_pad - H), (0, 0)))

    # bf16 weights feed the MXU natively on v6e/v7x. Explicit opt-in (changes
    # numerics slightly vs the f32 PyTorch reference); accumulation and all
    # post-matmul elementwise math (bias/relu/exp/FMA) stays f32 either way.
    wdt = jnp.bfloat16 if use_bf16_weights else x.dtype
    w1c, w2mc, w2lc = (w.astype(wdt) for w in (w1, w2_mu, w2_ls))
    b1f, b2muf, b2lsf = (b.astype(jnp.float32) for b in (b1, b2_mu, b2_ls))

    # Fuse mu/log_sigma heads when 2D <= 256 so the 256-wide MXU (v6e/v7x) is not
    # half idle; keep split heads when each head is already >= 128 lanes.
    fuse_heads = D <= 128

    # Standard-normal noise (torch.randn_like), generated wrapper-side (portable),
    # streamed per batch tile through the pipeline.
    eps = jax.random.normal(jax.random.PRNGKey(seed), (B, D), dtype=x.dtype)

    # --- tile sizing & VMEM budget -----------------------------------------
    itemsize = jnp.dtype(x.dtype).itemsize
    wsize = jnp.dtype(wdt).itemsize
    sublane = {4: 8, 2: 16, 1: 32}.get(itemsize, 8)   # dtype sublane packing

    # VMEM bytes per batch row: double-buffered x/eps/out blocks plus the
    # [tb, H] f32 hidden (and its cast copy when the compute dtype != f32).
    per_row = 6 * D * itemsize + H_pad * 4
    if jnp.dtype(wdt) != jnp.dtype(jnp.float32):
        per_row += H_pad * wsize
    act_budget = 24 << 20            # stay below v7x's 32 MiB scoped default
    auto_tb = max(sublane, (act_budget // per_row) // sublane * sublane)

    if block_rows is None:
        block_rows = 512             # amortizes ~0.35 us/step; fits v5e/v6e/v7x
    tb = min(block_rows, B, auto_tb)
    if tb < B:                       # (8,128) rule unless the block spans full B
        tb = max(sublane, (tb // sublane) * sublane)
    grid = (pl.cdiv(B, tb),)

    weight_bytes = (D * H_pad + 2 * H_pad * D) * wsize + (H_pad + 2 * D) * 4
    vmem_est = tb * per_row + weight_bytes
    vmem_limit = int(min(max(2 * vmem_est + (4 << 20), 32 << 20), 64 << 20))

    # --- block specs --------------------------------------------------------
    act_spec = pl.BlockSpec((tb, D), lambda i: (i, 0))
    out_spec = pl.BlockSpec((tb, D), lambda i: (i, 0))

    # Parameters: constant index_map -> VMEM-resident across grid steps;
    # single-buffered so no second (never used) copy of each weight is allocated.
    def pinned(shape):
        return pl.BlockSpec(shape, lambda i: (0, 0), pipeline_mode=pl.Buffered(1))

    w1_spec = pinned((D, H_pad))
    b1_spec = pinned((1, H_pad))

    if fuse_heads:
        w2c = jnp.concatenate([w2mc, w2lc], axis=1)        # [H_pad, 2D]
        b2f = jnp.concatenate([b2muf, b2lsf], axis=1)      # [1, 2D]
        in_specs = [act_spec, act_spec, w1_spec, b1_spec,
                    pinned((H_pad, 2 * D)), pinned((1, 2 * D))]
        operands = (x, eps, w1c, b1f, w2c, b2f)
    else:
        in_specs = [act_spec, act_spec, w1_spec, b1_spec,
                    pinned((H_pad, D)), pinned((H_pad, D)),
                    pinned((1, D)), pinned((1, D))]
        operands = (x, eps, w1c, b1f, w2mc, w2lc, b2muf, b2lsf)

    return pl.pallas_call(
        _make_kernel(fuse_heads, D),
        out_shape=jax.ShapeDtypeStruct((B, D), x.dtype),
        grid_spec=pltpu.PrefetchScalarGridSpec(
            num_scalar_prefetch=0,
            grid=grid,
            in_specs=in_specs,
            out_specs=out_spec,
        ),
        compiler_params=pltpu.CompilerParams(
            dimension_semantics=("parallel",),   # batch tiles across TCs (v7x)
            vmem_limit_bytes=vmem_limit,
        ),
    )(*operands)


def reference_forward(x, params, seed):
    """Pure-JAX f32 reference of the full forward (same noise stream as the kernel)."""
    w1, b1, w2_mu, b2_mu, w2_ls, b2_ls = params
    h = jnp.maximum(x @ w1 + b1, 0.0)
    mu = h @ w2_mu + b2_mu
    log_sigma = h @ w2_ls + b2_ls
    eps = jax.random.normal(jax.random.PRNGKey(seed), mu.shape, dtype=x.dtype)
    return mu + jnp.exp(log_sigma) * eps


if __name__ == "__main__":
    # Small shapes: batch=16, feature dim D=32, T_net hidden H=64.
    # block_rows=8 -> grid of 2 steps, exercising the tiled/pipelined path.
    B, D, H = 16, 32, 64

    key = jax.random.PRNGKey(0)
    kx, kw1, kb1, kw2m, kw2l, kb2m, kb2l = jax.random.split(key, 7)

    x = jax.random.normal(kx, (B, D), dtype=jnp.float32)
    w1 = jax.random.normal(kw1, (D, H), jnp.float32) * (1.0 / jnp.sqrt(D))
    b1 = jax.random.normal(kb1, (1, H), jnp.float32) * 0.01
    w2_mu = jax.random.normal(kw2m, (H, D), jnp.float32) * (1.0 / jnp.sqrt(H))
    b2_mu = jax.random.normal(kb2m, (1, D), jnp.float32) * 0.01
    w2_ls = jax.random.normal(kw2l, (H, D), jnp.float32) * (0.5 / jnp.sqrt(H))
    b2_ls = jax.random.normal(kb2l, (1, D), jnp.float32) * 0.01
    params = (w1, b1, w2_mu, b2_mu, w2_ls, b2_ls)

    out = jax.block_until_ready(
        gaussian_entropic_not_forward(x, params, seed=42, block_rows=8))
    assert out.shape == (B, D) and out.dtype == x.dtype
    assert bool(jnp.all(jnp.isfinite(out)))

    # Exact-semantics check (f32 weights): kernel == pure-JAX forward with the
    # same noise stream.
    ref = reference_forward(x, params, seed=42)
    assert bool(jnp.allclose(out, ref, atol=2e-2, rtol=2e-2))

    # Determinism: same seed -> identical sample; different seed -> different sample.
    out_same = jax.block_until_ready(
        gaussian_entropic_not_forward(x, params, seed=42, block_rows=8))
    assert bool(jnp.array_equal(out, out_same))
    out_other = jax.block_until_ready(
        gaussian_entropic_not_forward(x, params, seed=7, block_rows=8))
    assert not bool(jnp.array_equal(out, out_other))

    # bf16-weight MXU fast path (explicit numerics trade-off): looser tolerance.
    out_bf16 = jax.block_until_ready(
        gaussian_entropic_not_forward(x, params, seed=42, block_rows=8,
                                      use_bf16_weights=True))
    assert bool(jnp.all(jnp.isfinite(out_bf16)))
    assert bool(jnp.allclose(out_bf16, ref, atol=0.3, rtol=0.3))

    print("KERNEL_OK")
</pallas_src>

<mosaic_0001>
module attributes {stable_mosaic.version = 11 : i64} {
  func.func @kernel(%arg0: i32, %arg1: memref<8x32xf32, #tpu.memory_space<vmem>>, %arg2: memref<8x32xf32, #tpu.memory_space<vmem>>, %arg3: memref<32x128xf32, #tpu.memory_space<vmem>>, %arg4: memref<1x128xf32, #tpu.memory_space<vmem>>, %arg5: memref<128x64xf32, #tpu.memory_space<vmem>>, %arg6: memref<1x64xf32, #tpu.memory_space<vmem>>, %arg7: memref<8x32xf32, #tpu.memory_space<vmem>>) attributes {dimension_semantics = [#tpu.dimension_semantics<parallel>], iteration_bounds = array<i64: 2>, scalar_prefetch = 0 : i64, scratch_operands = 0 : i64, tpu.core_type = #tpu.core_type<tc>, window_params = [{transform_indices = @transform_0, window_bounds = array<i64: 8, 32>}, {transform_indices = @transform_1, window_bounds = array<i64: 8, 32>}, {pipeline_mode = #tpu.pipeline_mode<synchronous>, transform_indices = @transform_2, window_bounds = array<i64: 32, 128>}, {pipeline_mode = #tpu.pipeline_mode<synchronous>, transform_indices = @transform_3, window_bounds = array<i64: 1, 128>}, {pipeline_mode = #tpu.pipeline_mode<synchronous>, transform_indices = @transform_4, window_bounds = array<i64: 128, 64>}, {pipeline_mode = #tpu.pipeline_mode<synchronous>, transform_indices = @transform_5, window_bounds = array<i64: 1, 64>}, {transform_indices = @transform_6, window_bounds = array<i64: 8, 32>}]} {
    %c0 = arith.constant 0 : index
    %c0_0 = arith.constant 0 : index
    %0 = vector.load %arg1[%c0, %c0_0] : memref<8x32xf32, #tpu.memory_space<vmem>>, vector<8x32xf32>
    %c0_1 = arith.constant 0 : index
    %c0_2 = arith.constant 0 : index
    %1 = vector.load %arg3[%c0_1, %c0_2] : memref<32x128xf32, #tpu.memory_space<vmem>>, vector<32x128xf32>
    %cst = arith.constant dense<0.000000e+00> : vector<8x128xf32>
    %2 = tpu.matmul %0, %1, %cst {dimension_numbers = #tpu.dot_dimension_numbers<[1], [0], [0], [1], [0, 0, 1, 1], [], []>} : vector<8x32xf32>, vector<32x128xf32>, vector<8x128xf32> -> vector<8x128xf32>
    %c0_3 = arith.constant 0 : index
    %c0_4 = arith.constant 0 : index
    %3 = vector.load %arg4[%c0_3, %c0_4] : memref<1x128xf32, #tpu.memory_space<vmem>>, vector<1x128xf32>
    %4 = vector.broadcast %3 : vector<1x128xf32> to vector<8x128xf32>
    %5 = arith.addf %2, %4 : vector<8x128xf32>
    %cst_5 = arith.constant 0.000000e+00 : f32
    %6 = vector.broadcast %cst_5 : f32 to vector<8x128xf32>
    %7 = arith.maximumf %5, %6 : vector<8x128xf32>
    %c0_6 = arith.constant 0 : index
    %c0_7 = arith.constant 0 : index
    %8 = vector.load %arg5[%c0_6, %c0_7] : memref<128x64xf32, #tpu.memory_space<vmem>>, vector<128x64xf32>
    %cst_8 = arith.constant dense<0.000000e+00> : vector<8x64xf32>
    %9 = tpu.matmul %7, %8, %cst_8 {dimension_numbers = #tpu.dot_dimension_numbers<[1], [0], [0], [1], [0, 0, 1, 1], [], []>} : vector<8x128xf32>, vector<128x64xf32>, vector<8x64xf32> -> vector<8x64xf32>
    %c0_9 = arith.constant 0 : index
    %c0_10 = arith.constant 0 : index
    %10 = vector.load %arg6[%c0_9, %c0_10] : memref<1x64xf32, #tpu.memory_space<vmem>>, vector<1x64xf32>
    %11 = vector.broadcast %10 : vector<1x64xf32> to vector<8x64xf32>
    %12 = arith.addf %9, %11 : vector<8x64xf32>
    %13 = vector.extract_strided_slice %12 {offsets = [0, 0], sizes = [8, 32], strides = [1, 1]} : vector<8x64xf32> to vector<8x32xf32>
    %14 = vector.extract_strided_slice %12 {offsets = [0, 32], sizes = [8, 32], strides = [1, 1]} : vector<8x64xf32> to vector<8x32xf32>
    %c0_11 = arith.constant 0 : index
    %c0_12 = arith.constant 0 : index
    %15 = vector.load %arg2[%c0_11, %c0_12] : memref<8x32xf32, #tpu.memory_space<vmem>>, vector<8x32xf32>
    %16 = math.exp %14 : vector<8x32xf32>
    %17 = arith.mulf %16, %15 : vector<8x32xf32>
    %18 = arith.addf %13, %17 : vector<8x32xf32>
    %c0_13 = arith.constant 0 : index
    %c0_14 = arith.constant 0 : index
    %19 = vector.load %arg7[%c0_13, %c0_14] : memref<8x32xf32, #tpu.memory_space<vmem>>, vector<8x32xf32>
    tpu.vector_store %arg7[%c0_13, %c0_14], %18 {strides = array<i32>} : memref<8x32xf32, #tpu.memory_space<vmem>>, vector<8x32xf32>,
    return
  }
  func.func @transform_0(%arg0: i32) -> (i32, i32) {
    %c0_i32 = arith.constant 0 : i32
    %c0_i32_0 = arith.constant 0 : i32
    return %arg0, %c0_i32 : i32, i32
  }
  func.func @transform_1(%arg0: i32) -> (i32, i32) {
    %c0_i32 = arith.constant 0 : i32
    %c0_i32_0 = arith.constant 0 : i32
    return %arg0, %c0_i32 : i32, i32
  }
  func.func @transform_2(%arg0: i32) -> (i32, i32) {
    %c0_i32 = arith.constant 0 : i32
    %c0_i32_0 = arith.constant 0 : i32
    %c0_i32_1 = arith.constant 0 : i32
    return %c0_i32, %c0_i32_0 : i32, i32
  }
  func.func @transform_3(%arg0: i32) -> (i32, i32) {
    %c0_i32 = arith.constant 0 : i32
    %c0_i32_0 = arith.constant 0 : i32
    %c0_i32_1 = arith.constant 0 : i32
    return %c0_i32, %c0_i32_0 : i32, i32
  }
  func.func @transform_4(%arg0: i32) -> (i32, i32) {
    %c0_i32 = arith.constant 0 : i32
    %c0_i32_0 = arith.constant 0 : i32
    %c0_i32_1 = arith.constant 0 : i32
    return %c0_i32, %c0_i32_0 : i32, i32
  }
  func.func @transform_5(%arg0: i32) -> (i32, i32) {
    %c0_i32 = arith.constant 0 : i32
    %c0_i32_0 = arith.constant 0 : i32
    %c0_i32_1 = arith.constant 0 : i32
    return %c0_i32, %c0_i32_0 : i32, i32
  }
  func.func @transform_6(%arg0: i32) -> (i32, i32) {
    %c0_i32 = arith.constant 0 : i32
    %c0_i32_0 = arith.constant 0 : i32
    return %arg0, %c0_i32 : i32, i32
  }
}

</mosaic_0001>

<llo_original>
// kernel: tpu_custom_call.1
$region0: #{tpu_custom_call.1}
  #allocation0 [shape = 'u32[]', space=smem, size = 0x4, offset = 0x4, fixed_abs, tag = 'smem constant byte address 0x4 - core index']
  #allocation1 [shape = 'u32[144,128]{1,0:T(1,128)}', space=vmem, size = 0x12000, scoped, tag = 'internal scratch']
  %s0 = inlined_call_operand.vmem [shape: f32[16,32], index: 0, kind: input, shape index: {}]
  %s1 = inlined_call_operand.vmem [shape: f32[16,32], index: 1, kind: input, shape index: {}]
  %s2 = inlined_call_operand.vmem [shape: f32[32,128], index: 2, kind: input, shape index: {}]
  %s3 = inlined_call_operand.vmem [shape: f32[1,128], index: 3, kind: input, shape index: {}]
  %s4 = inlined_call_operand.vmem [shape: f32[128,64], index: 4, kind: input, shape index: {}]
  %s5 = inlined_call_operand.vmem [shape: f32[1,64], index: 5, kind: input, shape index: {}]
  %s6 = inlined_call_operand.hbm [shape: f32[16,32], index: 6, kind: output, shape index: {}]
  %s7 = sld [smem:[#allocation0]]
  $region57: #{tpu_custom_call.1} parent=0
    _
  %s9 = ssub.s32 1, %s7
  %s10 = scalar_select 0, %s9, %s7
  $region1: #{tpu_custom_call.1} parent=0
    #allocation2 [shape = 'u8[8192]{0}', space=vmem, size = 0x2000, scoped, tag = 'output window, operand 0']
    #allocation3 [shape = 's32[2]{0}', space=sflag, size = 0x8, scoped, tag = 'scoped memory for tpu_custom_call.1']
    %11 = vsyncpa [#allocation3], 0
    %s12 = scalar_lea.sflag [#allocation3], 1
    %13 = vsyncpa %s12, 0
    loop: start=0, step=1, limit=4
    $region2: #{tpu_custom_call.1} parent=1 // loop_pre_header
      _
    $region3: #{tpu_custom_call.1} parent=1 // loop_header
      %s15 = sphi 0, %s19
      %p16 = scmp.ge.s32.totalorder %s15, 4
      %s25 = sphi 0, %s27
      %s28 = sphi 0, %s25
      %s29 = sphi 0, %s28
      %s45 = sphi 0, %s29
      %s51 = sphi 0, %s53
      %s54 = sphi 0, %s51
      %s55 = sphi 0, %s54
      %s71 = sphi 0, %s55
      %s75 = sphi 0, %s75
      %s77 = sphi 0, %s75
      %s78 = sphi 0, %s77
      %s92 = sphi 0, %s78
      %s96 = sphi 0, %s96
      %s98 = sphi 0, %s96
      %s99 = sphi 0, %s98
      %s113 = sphi 0, %s99
      %s117 = sphi 0, %s117
      %s119 = sphi 0, %s117
      %s120 = sphi 0, %s119
      %s134 = sphi 0, %s120
      %s138 = sphi 0, %s138
      %s140 = sphi 0, %s138
      %s141 = sphi 0, %s140
      %s155 = sphi 0, %s141
      %s161 = sphi 0, %s163
      %s164 = sphi 0, %s161
      %s165 = sphi 0, %s164
      %s181 = sphi 0, %s165
    $region4: #{tpu_custom_call.1} parent=1 // loop_header_branch
      %18 = sbr.rel (%p16) target = $region8
    $region5: #{tpu_custom_call.1} parent=1 // loop_body
      %s20 = ssub.s32 %s15, 1
      %s21 = ssub.s32 %s15, 2
      %s22 = sadd.s32 %s15, 1
      %s23 = ssub.s32 %s15, %s22
      %p24 = scmp.eq.s32.totalorder %s23, 0
      %s26 = sadd.s32 %s25, 1
      %s27 = scalar_select %p24, %s25, %s26
      %p30 = pneg %p24
      %p31 = scmp.eq.s32.totalorder %s15, 1
      %p32 = por %p30, %p31
      %p33 = scmp.ne.s32.totalorder %s25, %s28
      %p34 = scmp.eq.s32.totalorder %s15, 0
      %p35 = por %p33, %p34
      %p36 = scmp.ne.s32.totalorder %s25, %s28
      %p37 = scmp.eq.s32.totalorder %s20, 1
      %p38 = por %p36, %p37
      %p39 = scmp.ne.s32.totalorder %s28, %s29
      %p40 = scmp.eq.s32.totalorder %s20, 0
      %p41 = por %p39, %p40
      %p42 = scmp.ne.s32.totalorder %s28, %s29
      %p43 = scmp.eq.s32.totalorder %s21, 1
      %p44 = por %p42, %p43
      %p46 = scmp.ne.s32.totalorder %s29, %s45
      %p47 = scmp.eq.s32.totalorder %s21, 0
      %p48 = por %p46, %p47
      %s49 = ssub.s32 %s15, %s22
      %p50 = scmp.eq.s32.totalorder %s49, 0
      %s52 = sadd.s32 %s51, 1
      %s53 = scalar_select %p50, %s51, %s52
      %p56 = pneg %p50
      %p57 = scmp.eq.s32.totalorder %s15, 1
      %p58 = por %p56, %p57
      %p59 = scmp.ne.s32.totalorder %s51, %s54
      %p60 = scmp.eq.s32.totalorder %s15, 0
      %p61 = por %p59, %p60
      %p62 = scmp.ne.s32.totalorder %s51, %s54
      %p63 = scmp.eq.s32.totalorder %s20, 1
      %p64 = por %p62, %p63
      %p65 = scmp.ne.s32.totalorder %s54, %s55
      %p66 = scmp.eq.s32.totalorder %s20, 0
      %p67 = por %p65, %p66
      %p68 = scmp.ne.s32.totalorder %s54, %s55
      %p69 = scmp.eq.s32.totalorder %s21, 1
      %p70 = por %p68, %p69
      %p72 = scmp.ne.s32.totalorder %s55, %s71
      %p73 = scmp.eq.s32.totalorder %s21, 0
      %p74 = por %p72, %p73
      %s76 = sadd.s32 %s75, 1
      %p79 = scmp.eq.s32.totalorder %s15, 1
      %p80 = scmp.ne.s32.totalorder %s75, %s77
      %p81 = scmp.eq.s32.totalorder %s15, 0
      %p82 = por %p80, %p81
      %p83 = scmp.ne.s32.totalorder %s75, %s77
      %p84 = scmp.eq.s32.totalorder %s20, 1
      %p85 = por %p83, %p84
      %p86 = scmp.ne.s32.totalorder %s77, %s78
      %p87 = scmp.eq.s32.totalorder %s20, 0
      %p88 = por %p86, %p87
      %p89 = scmp.ne.s32.totalorder %s77, %s78
      %p90 = scmp.eq.s32.totalorder %s21, 1
      %p91 = por %p89, %p90
      %p93 = scmp.ne.s32.totalorder %s78, %s92
      %p94 = scmp.eq.s32.totalorder %s21, 0
      %p95 = por %p93, %p94
      %s97 = sadd.s32 %s96, 1
      %p100 = scmp.eq.s32.totalorder %s15, 1
      %p101 = scmp.ne.s32.totalorder %s96, %s98
      %p102 = scmp.eq.s32.totalorder %s15, 0
      %p103 = por %p101, %p102
      %p104 = scmp.ne.s32.totalorder %s96, %s98
      %p105 = scmp.eq.s32.totalorder %s20, 1
      %p106 = por %p104, %p105
      %p107 = scmp.ne.s32.totalorder %s98, %s99
      %p108 = scmp.eq.s32.totalorder %s20, 0
      %p109 = por %p107, %p108
      %p110 = scmp.ne.s32.totalorder %s98, %s99
      %p111 = scmp.eq.s32.totalorder %s21, 1
      %p112 = por %p110, %p111
      %p114 = scmp.ne.s32.totalorder %s99, %s113
      %p115 = scmp.eq.s32.totalorder %s21, 0
      %p116 = por %p114, %p115
      %s118 = sadd.s32 %s117, 1
      %p121 = scmp.eq.s32.totalorder %s15, 1
      %p122 = scmp.ne.s32.totalorder %s117, %s119
      %p123 = scmp.eq.s32.totalorder %s15, 0
      %p124 = por %p122, %p123
      %p125 = scmp.ne.s32.totalorder %s117, %s119
      %p126 = scmp.eq.s32.totalorder %s20, 1
      %p127 = por %p125, %p126
      %p128 = scmp.ne.s32.totalorder %s119, %s120
      %p129 = scmp.eq.s32.totalorder %s20, 0
      %p130 = por %p128, %p129
      %p131 = scmp.ne.s32.totalorder %s119, %s120
      %p132 = scmp.eq.s32.totalorder %s21, 1
      %p133 = por %p131, %p132
      %p135 = scmp.ne.s32.totalorder %s120, %s134
      %p136 = scmp.eq.s32.totalorder %s21, 0
      %p137 = por %p135, %p136
      %s139 = sadd.s32 %s138, 1
      %p142 = scmp.eq.s32.totalorder %s15, 1
      %p143 = scmp.ne.s32.totalorder %s138, %s140
      %p144 = scmp.eq.s32.totalorder %s15, 0
      %p145 = por %p143, %p144
      %p146 = scmp.ne.s32.totalorder %s138, %s140
      %p147 = scmp.eq.s32.totalorder %s20, 1
      %p148 = por %p146, %p147
      %p149 = scmp.ne.s32.totalorder %s140, %s141
      %p150 = scmp.eq.s32.totalorder %s20, 0
      %p151 = por %p149, %p150
      %p152 = scmp.ne.s32.totalorder %s140, %s141
      %p153 = scmp.eq.s32.totalorder %s21, 1
      %p154 = por %p152, %p153
      %p156 = scmp.ne.s32.totalorder %s141, %s155
      %p157 = scmp.eq.s32.totalorder %s21, 0
      %p158 = por %p156, %p157
      %s159 = ssub.s32 %s15, %s22
      %p160 = scmp.eq.s32.totalorder %s159, 0
      %s162 = sadd.s32 %s161, 1
      %s163 = scalar_select %p160, %s161, %s162
      %p166 = pneg %p160
      %p167 = scmp.eq.s32.totalorder %s15, 1
      %p168 = por %p166, %p167
      %p169 = scmp.ne.s32.totalorder %s161, %s164
      %p170 = scmp.eq.s32.totalorder %s15, 0
      %p171 = por %p169, %p170
      %p172 = scmp.ne.s32.totalorder %s161, %s164
      %p173 = scmp.eq.s32.totalorder %s20, 1
      %p174 = por %p172, %p173
      %p175 = scmp.ne.s32.totalorder %s164, %s165
      %p176 = scmp.eq.s32.totalorder %s20, 0
      %p177 = por %p175, %p176
      %p178 = scmp.ne.s32.totalorder %s164, %s165
      %p179 = scmp.eq.s32.totalorder %s21, 1
      %p180 = por %p178, %p179
      %p182 = scmp.ne.s32.totalorder %s165, %s181
      %p183 = scmp.eq.s32.totalorder %s21, 0
      %p184 = por %p182, %p183
      %p185 = scmp.le.s32.totalorder 1, %s15
      %p186 = scmp.lt.s32.totalorder %s15, 3
      %p187 = pnand %p185, %p186
      %p188 = pneg %p187
      // Predicated region
      $region9: #{tpu_custom_call.1} parent=5 // pred_check
        _
      $region10: #{tpu_custom_call.1} parent=5 // pred_check_branch
        %190 = sbr.rel (%p187) target = $region12
      $region11: #{tpu_custom_call.1} parent=5 // pred_region
        %s191 = ssub.s32 %s15, 1
        // Predicated region
        $region13: #{tpu_custom_call.1} parent=11 // pred_check
          %p192 = pneg %p88
        $region14: #{tpu_custom_call.1} parent=11 // pred_check_branch
          %194 = sbr.rel (%p192) target = $region16
        $region15: #{tpu_custom_call.1} parent=11 // pred_region
          _
        $region16: #{tpu_custom_call.1} parent=11 // pred_fallthru
          _
        // Predicated region
        $region17: #{tpu_custom_call.1} parent=11 // pred_check
          %p195 = pneg %p109
        $region18: #{tpu_custom_call.1} parent=11 // pred_check_branch
          %197 = sbr.rel (%p195) target = $region20
        $region19: #{tpu_custom_call.1} parent=11 // pred_region
          _
        $region20: #{tpu_custom_call.1} parent=11 // pred_fallthru
          _
        // Predicated region
        $region21: #{tpu_custom_call.1} parent=11 // pred_check
          %p198 = pneg %p130
        $region22: #{tpu_custom_call.1} parent=11 // pred_check_branch
          %200 = sbr.rel (%p198) target = $region24
        $region23: #{tpu_custom_call.1} parent=11 // pred_region
          _
        $region24: #{tpu_custom_call.1} parent=11 // pred_fallthru
          _
        // Predicated region
        $region25: #{tpu_custom_call.1} parent=11 // pred_check
          %p201 = pneg %p151
        $region26: #{tpu_custom_call.1} parent=11 // pred_check_branch
          %203 = sbr.rel (%p201) target = $region28
        $region27: #{tpu_custom_call.1} parent=11 // pred_region
          _
        $region28: #{tpu_custom_call.1} parent=11 // pred_fallthru
          _
      $region12: #{tpu_custom_call.1} parent=5 // pred_fallthru
        _
      %p204 = scmp.lt.s32.totalorder %s15, 2
      // Predicated region
      $region29: #{tpu_custom_call.1} parent=5 // pred_check
        %p205 = pneg %p204
      $region30: #{tpu_custom_call.1} parent=5 // pred_check_branch
        %207 = sbr.rel (%p205) target = $region32
      $region31: #{tpu_custom_call.1} parent=5 // pred_region
        // Predicated region
        $region33: #{tpu_custom_call.1} parent=31 // pred_check
          %p208 = pneg %p35
        $region34: #{tpu_custom_call.1} parent=31 // pred_check_branch
          %210 = sbr.rel (%p208) target = $region36
        $region35: #{tpu_custom_call.1} parent=31 // pred_region
          %p211 = scmp.lt.s32.totalorder %s15, 1
          %s212 = scalar_select %p211, %s15, 1
          %s213 = smul.addr %s212, 8
          %s214 = scalar_lea.vmem %s0, %s213
        $region36: #{tpu_custom_call.1} parent=31 // pred_fallthru
          _
        // Predicated region
        $region37: #{tpu_custom_call.1} parent=31 // pred_check
          %p215 = pneg %p61
        $region38: #{tpu_custom_call.1} parent=31 // pred_check_branch
          %217 = sbr.rel (%p215) target = $region40
        $region39: #{tpu_custom_call.1} parent=31 // pred_region
          %p218 = scmp.lt.s32.totalorder %s15, 1
          %s219 = scalar_select %p218, %s15, 1
          %s220 = smul.addr %s219, 8
          %s221 = scalar_lea.vmem %s1, %s220
        $region40: #{tpu_custom_call.1} parent=31 // pred_fallthru
          _
      $region32: #{tpu_custom_call.1} parent=5 // pred_fallthru
        _
      %p222 = scmp.le.s32.totalorder 1, %s15
      %p223 = scmp.lt.s32.totalorder %s15, 3
      %p224 = pnand %p222, %p223
      %p225 = pneg %p224
      // Predicated region
      $region41: #{tpu_custom_call.1} parent=5 // pred_check
        _
      $region42: #{tpu_custom_call.1} parent=5 // pred_check_branch
        %227 = sbr.rel (%p224) target = $region44
      $region43: #{tpu_custom_call.1} parent=5 // pred_region
        %s228 = ssub.s32 %s15, 1
        %p229 = scmp.lt.s32.totalorder %s20, 1
        %s230 = scalar_select %p229, %s20, 1
        %s231 = smul.addr %s230, 8
        %s232 = scalar_lea.vmem %s0, %s231
        %p233 = pneg %p41
        %p234 = pneg %p38
        %p235 = scmp.lt.s32.totalorder %s20, 1
        %s236 = scalar_select %p235, %s20, 1
        %s237 = smul.addr %s236, 8
        %s238 = scalar_lea.vmem %s1, %s237
        %p239 = pneg %p67
        %p240 = pneg %p64
        %p241 = pneg %p88
        %p242 = pneg %p85
        %p243 = pneg %p109
        %p244 = pneg %p106
        %p245 = pneg %p130
        %p246 = pneg %p127
        %p247 = pneg %p151
        %p248 = pneg %p148
        %p249 = pneg %p177
        %p250 = pneg %p174
        %s251 = sand.u32 %s164, 1
        %s252 = scalar_lea.sflag [#allocation3], %s251
        %s253 = sand.u32 %s164, 1
        %s254 = smul.addr %s253, 8
        %s255 = scalar_lea.vmem [#allocation2], %s254
        %p256 = scmp.lt.s32.totalorder %s20, 1
        %s257 = scalar_select %p256, %s20, 1
        %s258 = smul.addr %s257, 8
        %s259 = scalar_lea.vmem %s0, %s258
        %p260 = scmp.lt.s32.totalorder %s20, 1
        %s261 = scalar_select %p260, %s20, 1
        %s262 = smul.addr %s261, 8
        %s263 = scalar_lea.vmem %s1, %s262
        %v264 = vld [vmem:[%s259] sm:$0xff]
        %v265 = vld [vmem:[%s2] sm:$0xff]
        %v266 = vld [vmem:[%s2 + $0x8] sm:$0xff]
        %v267 = vld [vmem:[%s2 + $0x10] sm:$0xff]
        %v268 = vld [vmem:[%s2 + $0x18] sm:$0xff]
        %v269 = vld [vmem:[%s3] sm:$0x1]
        %v271 = vlaneseq
        %v272 = vshrl.u32 %v271, 7
        %v273 = vsub.s32 0, %v272
        %v274 = vrot.slane %v269, %v273
        %vm276 = vcmask 261120
        %v278 = vsel %vm276, %v264, 0
        %280 = vmatprep.subr.mxu0 0.0
        %281 = vmatpush1.msra.mxu0 0.0
        %282 = vmatprep.subr.mxu0 0.0
        %283 = vmatpush1.msra.mxu0 0.0
        %284 = vmatprep.subr.mxu0 0.0
        %285 = vmatpush1.msra.mxu0 0.0
        %286 = vmatprep.subr.mxu0 0.0
        %287 = vmatpush1.msra.mxu0 0.0
        %288 = vmatprep.subr.mxu0 0.0
        %289 = vmatpush1.msra.mxu0 0.0
        %290 = vmatprep.subr.mxu0 0.0
        %291 = vmatpush1.msra.mxu0 0.0
        %292 = vmatprep.subr.mxu0 0.0
        %293 = vmatpush1.msra.mxu0 0.0
        %294 = vmatprep.subr.mxu0 0.0
        %295 = vmatpush1.msra.mxu0 0.0
        %296 = vmatprep.subr.mxu0 0.0
        %297 = vmatpush1.msra.mxu0 0.0
        %298 = vmatprep.subr.mxu0 0.0
        %299 = vmatpush1.msra.mxu0 0.0
        %300 = vmatprep.subr.mxu0 0.0
        %301 = vmatpush1.msra.mxu0 0.0
        %302 = vmatprep.subr.mxu0 0.0
        %303 = vmatpush1.msra.mxu0 0.0
        %304 = vmatprep.subr.mxu0 0.0
        %305 = vmatpush1.msra.mxu0 %v268
        %306 = vmatprep.subr.mxu0 0.0
        %307 = vmatpush1.msra.mxu0 %v267
        %308 = vmatprep.subr.mxu0 0.0
        %309 = vmatpush1.msra.mxu0 %v266
        %310 = vmatprep.subr.mxu0 0.0
        %311 = vmatpush1.msra.mxu0 %v265
        %312 = vmatprep.subr.mxu0 0.0
        %313 = vmatpush2.msra.mxu0 0.0
        %314 = vmatprep.subr.mxu0 0.0
        %315 = vmatpush2.msra.mxu0 0.0
        %316 = vmatprep.subr.mxu0 0.0
        %317 = vmatpush2.msra.mxu0 0.0
        %318 = vmatprep.subr.mxu0 0.0
        %319 = vmatpush2.msra.mxu0 0.0
        %320 = vmatprep.subr.mxu0 0.0
        %321 = vmatpush2.msra.mxu0 0.0
        %322 = vmatprep.subr.mxu0 0.0
        %323 = vmatpush2.msra.mxu0 0.0
        %324 = vmatprep.subr.mxu0 0.0
        %325 = vmatpush2.msra.mxu0 0.0
        %326 = vmatprep.subr.mxu0 0.0
        %327 = vmatpush2.msra.mxu0 0.0
        %328 = vmatprep.subr.mxu0 0.0
        %329 = vmatpush2.msra.mxu0 0.0
        %330 = vmatprep.subr.mxu0 0.0
        %331 = vmatpush2.msra.mxu0 0.0
        %332 = vmatprep.subr.mxu0 0.0
        %333 = vmatpush2.msra.mxu0 0.0
        %334 = vmatprep.subr.mxu0 0.0
        %335 = vmatpush2.msra.mxu0 0.0
        %336 = vmatprep.subr.mxu0 0.0
        %337 = vmatpush2.msra.mxu0 0.0
        %338 = vmatprep.subr.mxu0 0.0
        %339 = vmatpush2.msra.mxu0 0.0
        %340 = vmatprep.subr.mxu0 0.0
        %341 = vmatpush2.msra.mxu0 0.0
        %342 = vmatprep.subr.mxu0 0.0
        %343 = vmatpush2.msra.mxu0 0.0
        %344 = vmatprep.mubr.f32.mxu0 0.0
        %345 = vmatmul.mubr.f32.gmra.mxu0 %v278
        %v346 = vpop.f32.mrf.mxu0
        %v347 = vadd.f32 %v274, %v346
        %v348 = vpop.f32.mrf.mxu0
        %349 = vdwg.mxu0
        %v350 = vmax.f32 %v347, 0.0
        %v351 = vld [vmem:[%s4] sm:$0xff]
        %v352 = vld [vmem:[%s4 + $0x8] sm:$0xff]
        %v353 = vld [vmem:[%s4 + $0x10] sm:$0xff]
        %v354 = vld [vmem:[%s4 + $0x18] sm:$0xff]
        %v355 = vld [vmem:[%s4 + $0x20] sm:$0xff]
        %v356 = vld [vmem:[%s4 + $0x28] sm:$0xff]
        %v357 = vld [vmem:[%s4 + $0x30] sm:$0xff]
        %v358 = vld [vmem:[%s4 + $0x38] sm:$0xff]
        %v359 = vld [vmem:[%s4 + $0x40] sm:$0xff]
        %v360 = vld [vmem:[%s4 + $0x48] sm:$0xff]
        %v361 = vld [vmem:[%s4 + $0x50] sm:$0xff]
        %v362 = vld [vmem:[%s4 + $0x58] sm:$0xff]
        %v363 = vld [vmem:[%s4 + $0x60] sm:$0xff]
        %v364 = vld [vmem:[%s4 + $0x68] sm:$0xff]
        %v365 = vld [vmem:[%s4 + $0x70] sm:$0xff]
        %v366 = vld [vmem:[%s4 + $0x78] sm:$0xff]
        %v367 = vld [vmem:[%s5] sm:$0x1]
        %v369 = vlaneseq
        %v370 = vshrl.u32 %v369, 7
        %v371 = vsub.s32 0, %v370
        %v372 = vrot.slane %v367, %v371
        %374 = vmatprep.subr.mxu0 0.0
        %375 = vmatpush1.msra.mxu0 %v366
        %376 = vmatprep.subr.mxu0 0.0
        %377 = vmatpush1.msra.mxu0 %v365
        %378 = vmatprep.subr.mxu0 0.0
        %379 = vmatpush1.msra.mxu0 %v364
        %380 = vmatprep.subr.mxu0 0.0
        %381 = vmatpush1.msra.mxu0 %v363
        %382 = vmatprep.subr.mxu0 0.0
        %383 = vmatpush1.msra.mxu0 %v362
        %384 = vmatprep.subr.mxu0 0.0
        %385 = vmatpush1.msra.mxu0 %v361
        %386 = vmatprep.subr.mxu0 0.0
        %387 = vmatpush1.msra.mxu0 %v360
        %388 = vmatprep.subr.mxu0 0.0
        %389 = vmatpush1.msra.mxu0 %v359
        %390 = vmatprep.subr.mxu0 0.0
        %391 = vmatpush1.msra.mxu0 %v358
        %392 = vmatprep.subr.mxu0 0.0
        %393 = vmatpush1.msra.mxu0 %v357
        %394 = vmatprep.subr.mxu0 0.0
        %395 = vmatpush1.msra.mxu0 %v356
        %396 = vmatprep.subr.mxu0 0.0
        %397 = vmatpush1.msra.mxu0 %v355
        %398 = vmatprep.subr.mxu0 0.0
        %399 = vmatpush1.msra.mxu0 %v354
        %400 = vmatprep.subr.mxu0 0.0
        %401 = vmatpush1.msra.mxu0 %v353
        %402 = vmatprep.subr.mxu0 0.0
        %403 = vmatpush1.msra.mxu0 %v352
        %404 = vmatprep.subr.mxu0 0.0
        %405 = vmatpush1.msra.mxu0 %v351
        %406 = vmatprep.subr.mxu0 0.0
        %407 = vmatpush2.msra.mxu0 0.0
        %408 = vmatprep.subr.mxu0 0.0
        %409 = vmatpush2.msra.mxu0 0.0
        %410 = vmatprep.subr.mxu0 0.0
        %411 = vmatpush2.msra.mxu0 0.0
        %412 = vmatprep.subr.mxu0 0.0
        %413 = vmatpush2.msra.mxu0 0.0
        %414 = vmatprep.subr.mxu0 0.0
        %415 = vmatpush2.msra.mxu0 0.0
        %416 = vmatprep.subr.mxu0 0.0
        %417 = vmatpush2.msra.mxu0 0.0
        %418 = vmatprep.subr.mxu0 0.0
        %419 = vmatpush2.msra.mxu0 0.0
        %420 = vmatprep.subr.mxu0 0.0
        %421 = vmatpush2.msra.mxu0 0.0
        %422 = vmatprep.subr.mxu0 0.0
        %423 = vmatpush2.msra.mxu0 0.0
        %424 = vmatprep.subr.mxu0 0.0
        %425 = vmatpush2.msra.mxu0 0.0
        %426 = vmatprep.subr.mxu0 0.0
        %427 = vmatpush2.msra.mxu0 0.0
        %428 = vmatprep.subr.mxu0 0.0
        %429 = vmatpush2.msra.mxu0 0.0
        %430 = vmatprep.subr.mxu0 0.0
        %431 = vmatpush2.msra.mxu0 0.0
        %432 = vmatprep.subr.mxu0 0.0
        %433 = vmatpush2.msra.mxu0 0.0
        %434 = vmatprep.subr.mxu0 0.0
        %435 = vmatpush2.msra.mxu0 0.0
        %436 = vmatprep.subr.mxu0 0.0
        %437 = vmatpush2.msra.mxu0 0.0
        %438 = vmatprep.mubr.f32.mxu0 0.0
        %439 = vmatmul.mubr.f32.gmra.mxu0 %v350
        %v440 = vpop.f32.mrf.mxu0
        %v441 = vadd.f32 %v372, %v440
        %v442 = vpop.f32.mrf.mxu0
        %443 = vdwg.mxu0
        %v444 = vld [vmem:[%s263] sm:$0xff]
        %v445 = vmul.f32 %v441, 1.442695
        %v446 = vpow.pop %v445
        %448 = vrot.lane.b32.xlu0 %v444, 32
        %v449 = vpop.permute.xlu0 %448
        %v451 = vmul.f32 %v446, %v449
        %453 = vrot.lane.b32.xlu0 %v451, 96
        %v454 = vpop.permute.xlu0 %453
        %v456 = vadd.f32 %v441, %v454
        %457 = vst.msk [vmem:[%s255] sm:$0xff] %vm276, %v456
        %s458 = sand.u32 %s164, 1
        %s459 = scalar_lea.sflag [#allocation3], %s458
        %s460 = sand.u32 %s164, 1
        %s461 = smul.addr %s460, 8
        %s462 = scalar_lea.vmem [#allocation2], %s461
        // Predicated region
        $region45: #{tpu_custom_call.1} parent=43 // pred_check
          %p463 = pneg %p174
        $region46: #{tpu_custom_call.1} parent=43 // pred_check_branch
          %465 = sbr.rel (%p463) target = $region48
        $region47: #{tpu_custom_call.1} parent=43 // pred_region
          %s467 = ssub.s32 128, 128
          %468 = vsyncadd %s459, %s467
          %s469 = smul.addr %s20, 128
          %s470 = scalar_lea.hbm %s6, %s469
          %s472 = sshll.u32 %s462, 4
          %s473 = int_to_ptr.vmem [resolvable:$true] %s472
          %475 = dma.vmem_to_hbm [thread:$0]  %s473, 128, %s470, %s459
        $region48: #{tpu_custom_call.1} parent=43 // pred_fallthru
          _
      $region44: #{tpu_custom_call.1} parent=5 // pred_fallthru
        _
      %p476 = scmp.le.s32.totalorder 2, %s15
      // Predicated region
      $region49: #{tpu_custom_call.1} parent=5 // pred_check
        %p477 = pneg %p476
      $region50: #{tpu_custom_call.1} parent=5 // pred_check_branch
        %479 = sbr.rel (%p477) target = $region52
      $region51: #{tpu_custom_call.1} parent=5 // pred_region
        %s480 = ssub.s32 %s15, 2
        // Predicated region
        $region53: #{tpu_custom_call.1} parent=51 // pred_check
          %p481 = pneg %p180
        $region54: #{tpu_custom_call.1} parent=51 // pred_check_branch
          %483 = sbr.rel (%p481) target = $region56
        $region55: #{tpu_custom_call.1} parent=51 // pred_region
          %s484 = sand.u32 %s165, 1
          %s485 = scalar_lea.sflag [#allocation3], %s484
          %s486 = sand.u32 %s165, 1
          %s487 = smul.addr %s486, 8
          %s488 = scalar_lea.vmem [#allocation2], %s487
          %489 = dma.done %s485, 128
        $region56: #{tpu_custom_call.1} parent=51 // pred_fallthru
          _
      $region52: #{tpu_custom_call.1} parent=5 // pred_fallthru
        _
    $region6: #{tpu_custom_call.1} parent=1 // loop_footer
      %s19 = sadd.s32 1, %s15
    $region7: #{tpu_custom_call.1} parent=1 // loop_footer_branch
      %14 = sbr.rel target = $region3
    $region8: #{tpu_custom_call.1} parent=1 // loop_exit
      _
    %490 = vsyncpa [#allocation3], 1
    %s491 = scalar_lea.sflag [#allocation3], 1
    %492 = vsyncpa %s491, 1

</llo_original>
